<compile_context>
chip_gen: v7x
topology: tpu7x:2x2x1
jax: 0.10.0
libtpu: 0.0.40
codegen_flags: <defaults>
</compile_context>

<pallas_src>
import functools

import jax
import jax.numpy as jnp
from jax import lax
from jax.experimental import pallas as pl
from jax.experimental.pallas import tpu as pltpu


def _round_up(x, m):
    return ((x + m - 1) // m) * m


def _sublane_granule(dtype):
    # f32 -> 8, bf16 -> 16, int8/fp8 -> 32 (sub-32-bit dtypes pack along sublanes).
    return max(8, 32 // jnp.dtype(dtype).itemsize)


# ---------------------------------------------------------------------------
# Hot-path kernels:  out = (x @ Wt) * inv_sigma + b, tiled over (M, N, K).
# Wt is the pre-transposed (in, out) weight; standard last-first contraction.
# ---------------------------------------------------------------------------
def _sn_linear_kernel_f32out(inv_sigma_ref, x_ref, wt_ref, b_ref, o_ref):
    """f32 output: accumulate directly into the resident output block."""
    k = pl.program_id(2)

    @pl.when(k == 0)
    def _():
        o_ref[...] = jnp.zeros_like(o_ref)

    o_ref[...] += jnp.dot(x_ref[...], wt_ref[...],
                          preferred_element_type=jnp.float32)

    @pl.when(k == pl.num_programs(2) - 1)
    def _():
        o_ref[...] = o_ref[...] * inv_sigma_ref[0] + b_ref[...].astype(jnp.float32)


def _sn_linear_kernel_acc(inv_sigma_ref, x_ref, wt_ref, b_ref, o_ref, acc_ref):
    """Sub-f32 output: f32 VMEM accumulator scratch, cast at finalize."""
    k = pl.program_id(2)

    @pl.when(k == 0)
    def _():
        acc_ref[...] = jnp.zeros_like(acc_ref)

    acc_ref[...] += jnp.dot(x_ref[...], wt_ref[...],
                            preferred_element_type=jnp.float32)

    @pl.when(k == pl.num_programs(2) - 1)
    def _():
        out = acc_ref[...] * inv_sigma_ref[0] + b_ref[...].astype(jnp.float32)
        o_ref[...] = out.astype(o_ref.dtype)


# ---------------------------------------------------------------------------
# Power-iteration prologue (two matvecs, native-dtype weight, f32 math only
# on the small vectors; no f32 copy of W is ever materialized).
# ---------------------------------------------------------------------------
def _power_iteration(weight, u, eps=1e-12):
    """One spectral-norm power iteration. Returns (inv_sigma f32, u_new)."""
    eps2 = jnp.float32(eps) * jnp.float32(eps)
    u_w = u.astype(weight.dtype)
    # W^T u : contract over the out dim of (out, in) weight.
    wtu = lax.dot_general(u_w, weight, (((0,), (0,)), ((), ())),
                          preferred_element_type=jnp.float32)          # (in,)
    v = wtu * lax.rsqrt(jnp.maximum(jnp.sum(wtu * wtu), eps2))
    # W v : contract over the in dim.
    wv = lax.dot_general(weight, v.astype(weight.dtype),
                         (((1,), (0,)), ((), ())),
                         preferred_element_type=jnp.float32)           # (out,)
    u_new = wv * lax.rsqrt(jnp.maximum(jnp.sum(wv * wv), eps2))
    sigma = jnp.dot(u_new, wv)                                         # u^T W v
    # TODO(synk): PyTorch detaches only u and v (power iteration under no_grad)
    # while keeping sigma differentiable w.r.t. W; for this forward-only kernel
    # the whole scalar path is stop-gradient'd (forward values identical).
    inv_sigma = lax.stop_gradient(1.0 / sigma).astype(jnp.float32)
    u_new = lax.stop_gradient(u_new).astype(u.dtype)
    return inv_sigma, u_new


# ---------------------------------------------------------------------------
# Wrapper: tile selection, padding (+ one-time W transpose), pallas_call.
# ---------------------------------------------------------------------------
def spectral_linear(x, weight, bias, u):
    """x: (B, in), weight: (out, in), bias: (out,), u: (out,).

    Returns (out: (B, out), u_new: (out,))."""
    batch, in_features = x.shape
    out_features = weight.shape[0]
    out_dtype = x.dtype

    inv_sigma, u_new = _power_iteration(weight, u)
    inv_sigma = inv_sigma.reshape(1)

    x_item = jnp.dtype(x.dtype).itemsize
    w_item = jnp.dtype(weight.dtype).itemsize
    o_item = jnp.dtype(out_dtype).itemsize
    out_is_f32 = jnp.dtype(out_dtype) == jnp.dtype(jnp.float32)

    # --- M tile: reuse-aware. Small batch -> grid_M = 1 (W streamed once). ---
    m_gran = _sublane_granule(x.dtype)
    m_pad_min = _round_up(batch, m_gran)
    tm = m_pad_min if m_pad_min <= 512 else 512
    m_pad = _round_up(batch, tm)

    # --- N tile: lane granule 128, up to 512. ---
    n_lane = _round_up(out_features, 128)
    tn = min(512, n_lane)
    n_pad = _round_up(out_features, tn)

    # v7x: guarantee >= 2 tiles on the parallel axes so both TCs get work.
    if (m_pad // tm) * (n_pad // tn) == 1 and tn >= 256:
        tn = 128 * max(1, (tn // 128) // 2)
        n_pad = _round_up(out_features, tn)

    # --- K tile: big (or full K) to amortize per-step overhead. ---
    tk = min(2048, _round_up(in_features, 128))

    # VMEM guardrail: double-buffered footprint must stay well under the v7x
    # 64 MiB physical budget (and under vmem_limit_bytes below).
    def _footprint(tm_, tn_, tk_):
        f = (tm_ * tk_ * x_item * 2        # x tiles (double-buffered)
             + tk_ * tn_ * w_item * 2      # W tiles
             + tn_ * o_item * 2            # bias tiles
             + tm_ * tn_ * o_item * 2)     # output tiles
        if not out_is_f32:
            f += tm_ * tn_ * 4             # f32 accumulator scratch
        return f

    vmem_budget = 40 * 1024 * 1024
    while _footprint(tm, tn, tk) > vmem_budget and tk > 128:
        tk = max(128, tk // 2)
    k_pad = _round_up(in_features, tk)

    # Pad x; transpose+pad W once (fused XLA copy) so the kernel never
    # re-layouts the weight per tile.
    x_p = jnp.pad(x, ((0, m_pad - batch), (0, k_pad - in_features)))
    wt_p = jnp.pad(weight.T,
                   ((0, k_pad - in_features), (0, n_pad - out_features)))
    b_p = jnp.pad(bias, (0, n_pad - out_features)).reshape(1, n_pad)

    grid = (m_pad // tm, n_pad // tn, k_pad // tk)

    kernel = _sn_linear_kernel_f32out if out_is_f32 else _sn_linear_kernel_acc
    scratch_shapes = [] if out_is_f32 else [pltpu.VMEM((tm, tn), jnp.float32)]

    out_p = pl.pallas_call(
        kernel,
        out_shape=jax.ShapeDtypeStruct((m_pad, n_pad), out_dtype),
        grid_spec=pltpu.PrefetchScalarGridSpec(
            num_scalar_prefetch=0,
            grid=grid,
            in_specs=[
                # 1/sigma scalar, resident in SMEM.
                pl.BlockSpec(memory_space=pltpu.MemorySpace.SMEM),
                pl.BlockSpec((tm, tk), lambda i, j, k: (i, k)),   # x tile
                pl.BlockSpec((tk, tn), lambda i, j, k: (k, j)),   # W^T tile
                pl.BlockSpec((1, tn), lambda i, j, k: (0, j)),    # bias tile
            ],
            out_specs=pl.BlockSpec((tm, tn), lambda i, j, k: (i, j)),
            scratch_shapes=scratch_shapes,
        ),
        compiler_params=pltpu.CompilerParams(
            dimension_semantics=("parallel", "parallel", "arbitrary"),
            vmem_limit_bytes=48 * 1024 * 1024,
        ),
    )(inv_sigma, x_p, wt_p, b_p)

    return out_p[:batch, :out_features], u_new


def cond_spectral_linear(inputs, weight, bias, u):
    """Mirrors CondSpectralLinear.forward: (img, label) -> (out, label).
    Also returns u_new so callers can carry the power-iteration state."""
    img, label = inputs
    out, u_new = spectral_linear(img, weight, bias, u)
    return (out, label), u_new


# ---------------------------------------------------------------------------
# Pure-JAX reference (matches PyTorch spectral_norm training-mode forward).
# ---------------------------------------------------------------------------
def spectral_linear_ref(x, weight, bias, u):
    eps = 1e-12
    wtu = u @ weight
    v = wtu / jnp.maximum(jnp.linalg.norm(wtu), eps)
    wv = weight @ v
    u_new = wv / jnp.maximum(jnp.linalg.norm(wv), eps)
    sigma = u_new @ (weight @ v)
    return x @ (weight / sigma).T + bias


if __name__ == "__main__":
    key = jax.random.PRNGKey(0)
    k_x, k_w, k_b, k_u, k_l = jax.random.split(key, 5)

    batch, in_features, out_features = 8, 32, 16

    # Deterministic init (nn.Linear-style uniform(-1/sqrt(in), 1/sqrt(in))).
    bound = 1.0 / jnp.sqrt(jnp.float32(in_features))
    weight = jax.random.uniform(k_w, (out_features, in_features), jnp.float32, -bound, bound)
    bias = jax.random.uniform(k_b, (out_features,), jnp.float32, -bound, bound)
    # spectral_norm's u buffer: random normal, normalized.
    u0 = jax.random.normal(k_u, (out_features,), jnp.float32)
    u0 = u0 / jnp.maximum(jnp.linalg.norm(u0), 1e-12)

    img = jax.random.normal(k_x, (batch, in_features), jnp.float32)
    label = jax.random.randint(k_l, (batch,), 0, 10)

    (out, label_out), u_new = cond_spectral_linear((img, label), weight, bias, u0)
    out = jax.block_until_ready(out)

    ref = spectral_linear_ref(img, weight, bias, u0)
    assert out.shape == (batch, out_features)
    assert label_out.shape == (batch,)
    assert u_new.shape == (out_features,)
    assert jnp.allclose(out, ref, atol=1e-5, rtol=1e-5), "mismatch vs JAX reference"

    print("KERNEL_OK")
</pallas_src>

<mosaic_0001>
module attributes {stable_mosaic.version = 11 : i64} {
  func.func @_sn_linear_kernel_f32out(%arg0: i32, %arg1: i32, %arg2: i32, %arg3: memref<1xf32, #tpu.memory_space<smem>>, %arg4: memref<8x128xf32, #tpu.memory_space<vmem>>, %arg5: memref<128x128xf32, #tpu.memory_space<vmem>>, %arg6: memref<1x128xf32, #tpu.memory_space<vmem>>, %arg7: memref<8x128xf32, #tpu.memory_space<vmem>>) attributes {dimension_semantics = [#tpu.dimension_semantics<parallel>, #tpu.dimension_semantics<parallel>, #tpu.dimension_semantics<arbitrary>], iteration_bounds = array<i64: 1, 1, 1>, scalar_prefetch = 0 : i64, scratch_operands = 0 : i64, tpu.core_type = #tpu.core_type<tc>, window_params = [{transform_indices = @transform_0, window_bounds = array<i64: 1>}, {transform_indices = @transform_1, window_bounds = array<i64: 8, 128>}, {transform_indices = @transform_2, window_bounds = array<i64: 128, 128>}, {transform_indices = @transform_3, window_bounds = array<i64: 1, 128>}, {transform_indices = @transform_4, window_bounds = array<i64: 8, 128>}]} {
    %c0_i32 = arith.constant 0 : i32
    %0 = arith.cmpi eq, %arg2, %c0_i32 : i32
    %1 = arith.extui %0 : i1 to i32
    %c0_i32_0 = arith.constant 0 : i32
    %2 = arith.cmpi ne, %1, %c0_i32_0 : i32
    scf.if %2 {
      %cst_10 = arith.constant 0.000000e+00 : f32
      %12 = vector.broadcast %cst_10 : f32 to vector<8x128xf32>
      %c0_11 = arith.constant 0 : index
      %c0_12 = arith.constant 0 : index
      %13 = vector.load %arg7[%c0_11, %c0_12] : memref<8x128xf32, #tpu.memory_space<vmem>>, vector<8x128xf32>
      tpu.vector_store %arg7[%c0_11, %c0_12], %12 {strides = array<i32>} : memref<8x128xf32, #tpu.memory_space<vmem>>, vector<8x128xf32>,
    } else {
    }
    %c0 = arith.constant 0 : index
    %c0_1 = arith.constant 0 : index
    %3 = vector.load %arg7[%c0, %c0_1] : memref<8x128xf32, #tpu.memory_space<vmem>>, vector<8x128xf32>
    %c0_2 = arith.constant 0 : index
    %c0_3 = arith.constant 0 : index
    %4 = vector.load %arg4[%c0_2, %c0_3] : memref<8x128xf32, #tpu.memory_space<vmem>>, vector<8x128xf32>
    %c0_4 = arith.constant 0 : index
    %c0_5 = arith.constant 0 : index
    %5 = vector.load %arg5[%c0_4, %c0_5] : memref<128x128xf32, #tpu.memory_space<vmem>>, vector<128x128xf32>
    %cst = arith.constant dense<0.000000e+00> : vector<8x128xf32>
    %6 = tpu.matmul %4, %5, %cst {dimension_numbers = #tpu.dot_dimension_numbers<[1], [0], [0], [1], [0, 0, 1, 1], [], []>} : vector<8x128xf32>, vector<128x128xf32>, vector<8x128xf32> -> vector<8x128xf32>
    %7 = arith.addf %3, %6 : vector<8x128xf32>
    %c0_6 = arith.constant 0 : index
    %c0_7 = arith.constant 0 : index
    %8 = vector.load %arg7[%c0_6, %c0_7] : memref<8x128xf32, #tpu.memory_space<vmem>>, vector<8x128xf32>
    tpu.vector_store %arg7[%c0_6, %c0_7], %7 {strides = array<i32>} : memref<8x128xf32, #tpu.memory_space<vmem>>, vector<8x128xf32>,
    %c0_i32_8 = arith.constant 0 : i32
    %9 = arith.cmpi eq, %arg2, %c0_i32_8 : i32
    %10 = arith.extui %9 : i1 to i32
    %c0_i32_9 = arith.constant 0 : i32
    %11 = arith.cmpi ne, %10, %c0_i32_9 : i32
    scf.if %11 {
      %c0_10 = arith.constant 0 : index
      %c0_11 = arith.constant 0 : index
      %12 = vector.load %arg7[%c0_10, %c0_11] : memref<8x128xf32, #tpu.memory_space<vmem>>, vector<8x128xf32>
      %c0_12 = arith.constant 0 : index
      %13 = memref.load %arg3[%c0_12] : memref<1xf32, #tpu.memory_space<smem>>
      %14 = vector.broadcast %13 : f32 to vector<8x128xf32>
      %15 = arith.mulf %12, %14 : vector<8x128xf32>
      %c0_13 = arith.constant 0 : index
      %c0_14 = arith.constant 0 : index
      %16 = vector.load %arg6[%c0_13, %c0_14] : memref<1x128xf32, #tpu.memory_space<vmem>>, vector<1x128xf32>
      %17 = vector.broadcast %16 : vector<1x128xf32> to vector<8x128xf32>
      %18 = arith.addf %15, %17 : vector<8x128xf32>
      %c0_15 = arith.constant 0 : index
      %c0_16 = arith.constant 0 : index
      %19 = vector.load %arg7[%c0_15, %c0_16] : memref<8x128xf32, #tpu.memory_space<vmem>>, vector<8x128xf32>
      tpu.vector_store %arg7[%c0_15, %c0_16], %18 {strides = array<i32>} : memref<8x128xf32, #tpu.memory_space<vmem>>, vector<8x128xf32>,
    } else {
    }
    return
  }
  func.func @transform_0(%arg0: i32, %arg1: i32, %arg2: i32) -> i32 {
    %c0_i32 = arith.constant 0 : i32
    %c0_i32_0 = arith.constant 0 : i32
    return %c0_i32 : i32
  }
  func.func @transform_1(%arg0: i32, %arg1: i32, %arg2: i32) -> (i32, i32) {
    %c0_i32 = arith.constant 0 : i32
    return %arg0, %arg2 : i32, i32
  }
  func.func @transform_2(%arg0: i32, %arg1: i32, %arg2: i32) -> (i32, i32) {
    %c0_i32 = arith.constant 0 : i32
    return %arg2, %arg1 : i32, i32
  }
  func.func @transform_3(%arg0: i32, %arg1: i32, %arg2: i32) -> (i32, i32) {
    %c0_i32 = arith.constant 0 : i32
    %c0_i32_0 = arith.constant 0 : i32
    return %c0_i32, %arg1 : i32, i32
  }
  func.func @transform_4(%arg0: i32, %arg1: i32, %arg2: i32) -> (i32, i32) {
    %c0_i32 = arith.constant 0 : i32
    return %arg0, %arg1 : i32, i32
  }
}

</mosaic_0001>

<llo_original>
// kernel: tpu_custom_call.1
$region0: #{tpu_custom_call.1}
  #allocation0 [shape = 'u32[]', space=smem, size = 0x4, offset = 0x4, fixed_abs, tag = 'smem constant byte address 0x4 - core index']
  #allocation1 [shape = 'u32[144,128]{1,0:T(1,128)}', space=vmem, size = 0x12000, scoped, tag = 'internal scratch']
  #allocation2 [shape = 'f32[1]{0:T(128)S(6)}', space=smem, size = 0x200, scoped, tag = 'scoped memory for tpu_custom_call.1']
  %s0 = inlined_call_operand.<no memory space> [shape: f32[1], index: 0, kind: input, shape index: {}]
  %s1 = inlined_call_operand.hbm [shape: f32[8,128], index: 1, kind: input, shape index: {}]
  %s2 = inlined_call_operand.hbm [shape: f32[128,128], index: 2, kind: input, shape index: {}]
  %s3 = inlined_call_operand.vmem [shape: f32[1,128], index: 3, kind: input, shape index: {}]
  %s4 = inlined_call_operand.hbm [shape: f32[8,128], index: 4, kind: output, shape index: {}]
  %s5 = sld [smem:[#allocation0]]
  $region42: #{tpu_custom_call.1} parent=0
    _
  %s7 = ssub.s32 1, %s5
  %s8 = scalar_select 0, %s7, %s5
  %9 = sst [smem:[#allocation2]] %s0
  $region1: #{tpu_custom_call.1} parent=0
    #allocation3 [shape = 'u8[4096]{0}', space=vmem, size = 0x1000, scoped, tag = 'input window, operand 1, single buffered']
    #allocation4 [shape = 's32[1]{0}', space=sflag, size = 0x4, scoped, tag = 'scoped memory for tpu_custom_call.1']
    #allocation5 [shape = 's32[1]{0}', space=sflag, size = 0x4, scoped, tag = 'scoped memory for tpu_custom_call.1']
    #allocation6 [shape = 'u8[65536]{0}', space=vmem, size = 0x10000, scoped, tag = 'input window, operand 2, single buffered']
    #allocation7 [shape = 's32[1]{0}', space=sflag, size = 0x4, scoped, tag = 'scoped memory for tpu_custom_call.1']
    #allocation8 [shape = 'u8[4096]{0}', space=vmem, size = 0x1000, scoped, tag = 'output window, operand 0, single buffered']
    %10 = vsyncpa [#allocation4], 0
    %11 = vsyncpa [#allocation7], 0
    %12 = vsyncpa [#allocation5], 0
    // Predicated region
    $region2: #{tpu_custom_call.1} parent=1 // pred_check
      _
    $region3: #{tpu_custom_call.1} parent=1 // pred_check_branch
      %14 = sbr.rel (0) target = $region5
    $region4: #{tpu_custom_call.1} parent=1 // pred_region
      _
    $region5: #{tpu_custom_call.1} parent=1 // pred_fallthru
      _
    // Predicated region
    $region6: #{tpu_custom_call.1} parent=1 // pred_check
      _
    $region7: #{tpu_custom_call.1} parent=1 // pred_check_branch
      %16 = sbr.rel (0) target = $region9
    $region8: #{tpu_custom_call.1} parent=1 // pred_region
      %s18 = ssub.s32 128, 128
      %19 = vsyncadd [#allocation4], %s18
      %s21 = sshll.u32 [#allocation3], 4
      %s22 = int_to_ptr.vmem [resolvable:$true] %s21
      %24 = dma.hbm_to_vmem [thread:$0]  %s1, 128, %s22, [#allocation4]
    $region9: #{tpu_custom_call.1} parent=1 // pred_fallthru
      _
    // Predicated region
    $region10: #{tpu_custom_call.1} parent=1 // pred_check
      _
    $region11: #{tpu_custom_call.1} parent=1 // pred_check_branch
      %26 = sbr.rel (0) target = $region13
    $region12: #{tpu_custom_call.1} parent=1 // pred_region
      %s28 = ssub.s32 2048, 2048
      %29 = vsyncadd [#allocation7], %s28
      %s30 = sshll.u32 [#allocation6], 4
      %s31 = int_to_ptr.vmem [resolvable:$true] %s30
      %36 = dma.hbm_to_vmem [thread:$0]  %s2, 2048, %s31, [#allocation7], 128, 128, 8
    $region13: #{tpu_custom_call.1} parent=1 // pred_fallthru
      _
    // Predicated region
    $region14: #{tpu_custom_call.1} parent=1 // pred_check
      _
    $region15: #{tpu_custom_call.1} parent=1 // pred_check_branch
      %38 = sbr.rel (0) target = $region17
    $region16: #{tpu_custom_call.1} parent=1 // pred_region
      _
    $region17: #{tpu_custom_call.1} parent=1 // pred_fallthru
      _
    // Predicated region
    $region18: #{tpu_custom_call.1} parent=1 // pred_check
      _
    $region19: #{tpu_custom_call.1} parent=1 // pred_check_branch
      %40 = sbr.rel (0) target = $region21
    $region20: #{tpu_custom_call.1} parent=1 // pred_region
      %41 = dma.done [#allocation4], 128
    $region21: #{tpu_custom_call.1} parent=1 // pred_fallthru
      _
    // Predicated region
    $region22: #{tpu_custom_call.1} parent=1 // pred_check
      _
    $region23: #{tpu_custom_call.1} parent=1 // pred_check_branch
      %43 = sbr.rel (0) target = $region25
    $region24: #{tpu_custom_call.1} parent=1 // pred_region
      %44 = dma.done [#allocation7], 2048
    $region25: #{tpu_custom_call.1} parent=1 // pred_fallthru
      _
    %p45 = scmp.eq.s32.totalorder 0, 0
    // Predicated region
    $region26: #{tpu_custom_call.1} parent=1 // pred_check
      %p46 = pneg %p45
    $region27: #{tpu_custom_call.1} parent=1 // pred_check_branch
      %48 = sbr.rel (%p46) target = $region29
    $region28: #{tpu_custom_call.1} parent=1 // pred_region
      %49 = vst [vmem:[#allocation8] sm:$0xff] 0.0
    $region29: #{tpu_custom_call.1} parent=1 // pred_fallthru
      _
    %v50 = vld [vmem:[#allocation8] sm:$0xff]
    %v51 = vld [vmem:[#allocation3] sm:$0xff]
    %v52 = vld [vmem:[#allocation6] sm:$0xff]
    %v53 = vld [vmem:[#allocation6 + $0x8] sm:$0xff]
    %v54 = vld [vmem:[#allocation6 + $0x10] sm:$0xff]
    %v55 = vld [vmem:[#allocation6 + $0x18] sm:$0xff]
    %v56 = vld [vmem:[#allocation6 + $0x20] sm:$0xff]
    %v57 = vld [vmem:[#allocation6 + $0x28] sm:$0xff]
    %v58 = vld [vmem:[#allocation6 + $0x30] sm:$0xff]
    %v59 = vld [vmem:[#allocation6 + $0x38] sm:$0xff]
    %v60 = vld [vmem:[#allocation6 + $0x40] sm:$0xff]
    %v61 = vld [vmem:[#allocation6 + $0x48] sm:$0xff]
    %v62 = vld [vmem:[#allocation6 + $0x50] sm:$0xff]
    %v63 = vld [vmem:[#allocation6 + $0x58] sm:$0xff]
    %v64 = vld [vmem:[#allocation6 + $0x60] sm:$0xff]
    %v65 = vld [vmem:[#allocation6 + $0x68] sm:$0xff]
    %v66 = vld [vmem:[#allocation6 + $0x70] sm:$0xff]
    %v67 = vld [vmem:[#allocation6 + $0x78] sm:$0xff]
    %68 = vmatprep.subr.mxu0 0.0
    %69 = vmatpush1.msra.mxu0 %v52
    %70 = vmatprep.subr.mxu0 0.0
    %71 = vmatpush1.msra.mxu0 %v53
    %72 = vmatprep.subr.mxu0 0.0
    %73 = vmatpush1.msra.mxu0 %v54
    %74 = vmatprep.subr.mxu0 0.0
    %75 = vmatpush1.msra.mxu0 %v55
    %76 = vmatprep.subr.mxu0 0.0
    %77 = vmatpush1.msra.mxu0 %v56
    %78 = vmatprep.subr.mxu0 0.0
    %79 = vmatpush1.msra.mxu0 %v57
    %80 = vmatprep.subr.mxu0 0.0
    %81 = vmatpush1.msra.mxu0 %v58
    %82 = vmatprep.subr.mxu0 0.0
    %83 = vmatpush1.msra.mxu0 %v59
    %84 = vmatprep.subr.mxu0 0.0
    %85 = vmatpush1.msra.mxu0 %v60
    %86 = vmatprep.subr.mxu0 0.0
    %87 = vmatpush1.msra.mxu0 %v61
    %88 = vmatprep.subr.mxu0 0.0
    %89 = vmatpush1.msra.mxu0 %v62
    %90 = vmatprep.subr.mxu0 0.0
    %91 = vmatpush1.msra.mxu0 %v63
    %92 = vmatprep.subr.mxu0 0.0
    %93 = vmatpush1.msra.mxu0 %v64
    %94 = vmatprep.subr.mxu0 0.0
    %95 = vmatpush1.msra.mxu0 %v65
    %96 = vmatprep.subr.mxu0 0.0
    %97 = vmatpush1.msra.mxu0 %v66
    %98 = vmatprep.subr.mxu0 0.0
    %99 = vmatpush1.msra.mxu0 %v67
    %100 = vmatprep.subr.mxu0 0.0
    %101 = vmatpush1.msra.mxu0 0.0
    %102 = vmatprep.subr.mxu0 0.0
    %103 = vmatpush1.msra.mxu0 0.0
    %104 = vmatprep.subr.mxu0 0.0
    %105 = vmatpush1.msra.mxu0 0.0
    %106 = vmatprep.subr.mxu0 0.0
    %107 = vmatpush1.msra.mxu0 0.0
    %108 = vmatprep.subr.mxu0 0.0
    %109 = vmatpush1.msra.mxu0 0.0
    %110 = vmatprep.subr.mxu0 0.0
    %111 = vmatpush1.msra.mxu0 0.0
    %112 = vmatprep.subr.mxu0 0.0
    %113 = vmatpush1.msra.mxu0 0.0
    %114 = vmatprep.subr.mxu0 0.0
    %115 = vmatpush1.msra.mxu0 0.0
    %116 = vmatprep.subr.mxu0 0.0
    %117 = vmatpush1.msra.mxu0 0.0
    %118 = vmatprep.subr.mxu0 0.0
    %119 = vmatpush1.msra.mxu0 0.0
    %120 = vmatprep.subr.mxu0 0.0
    %121 = vmatpush1.msra.mxu0 0.0
    %122 = vmatprep.subr.mxu0 0.0
    %123 = vmatpush1.msra.mxu0 0.0
    %124 = vmatprep.subr.mxu0 0.0
    %125 = vmatpush1.msra.mxu0 0.0
    %126 = vmatprep.subr.mxu0 0.0
    %127 = vmatpush1.msra.mxu0 0.0
    %128 = vmatprep.subr.mxu0 0.0
    %129 = vmatpush1.msra.mxu0 0.0
    %130 = vmatprep.subr.mxu0 0.0
    %131 = vmatpush1.msra.mxu0 0.0
    %132 = vmatprep.mubr.f32.mxu0 0.0
    %133 = vmatmul.mubr.f32.gmra.mrb[0].mxu0 %v51
    %v134 = vpop.f32.mrb[0].mxu0
    %v135 = vadd.f32 0.0, %v134
    %v136 = vpop.f32.mrb[0].mxu0
    %137 = vdwg.mxu0
    %v138 = vadd.f32 %v50, %v135
    %139 = vst [vmem:[#allocation8] sm:$0xff] %v138
    // Predicated region
    $region30: #{tpu_custom_call.1} parent=1 // pred_check
      %p140 = pneg %p45
    $region31: #{tpu_custom_call.1} parent=1 // pred_check_branch
      %142 = sbr.rel (%p140) target = $region33
    $region32: #{tpu_custom_call.1} parent=1 // pred_region
      %v143 = vld [vmem:[#allocation8] sm:$0xff]
      %s144 = sld [smem:[#allocation2]]
      %v145 = vstv %s144
      %v146 = vmul.f32 %v143, %v145
      %v147 = vld [vmem:[%s3] sm:$0x1]
      %v149 = vlaneseq
      %v150 = vshrl.u32 %v149, 7
      %v151 = vsub.s32 0, %v150
      %v152 = vrot.slane %v147, %v151
      %v154 = vadd.f32 %v146, %v152
      %155 = vst [vmem:[#allocation8] sm:$0xff] %v154
    $region33: #{tpu_custom_call.1} parent=1 // pred_fallthru
      _
    // Predicated region
    $region34: #{tpu_custom_call.1} parent=1 // pred_check
      _
    $region35: #{tpu_custom_call.1} parent=1 // pred_check_branch
      %157 = sbr.rel (0) target = $region37
    $region36: #{tpu_custom_call.1} parent=1 // pred_region
      %s159 = ssub.s32 128, 128
      %160 = vsyncadd [#allocation5], %s159
      %s162 = sshll.u32 [#allocation8], 4
      %s163 = int_to_ptr.vmem [resolvable:$true] %s162
      %165 = dma.vmem_to_hbm [thread:$0]  %s163, 128, %s4, [#allocation5]
    $region37: #{tpu_custom_call.1} parent=1 // pred_fallthru
      _
    // Predicated region
    $region38: #{tpu_custom_call.1} parent=1 // pred_check
      _
    $region39: #{tpu_custom_call.1} parent=1 // pred_check_branch
      %167 = sbr.rel (0) target = $region41
    $region40: #{tpu_custom_call.1} parent=1 // pred_region
      %168 = dma.done [#allocation5], 128
    $region41: #{tpu_custom_call.1} parent=1 // pred_fallthru
      _
    %169 = vsyncpa [#allocation4], 1
    %170 = vsyncpa [#allocation7], 1
    %171 = vsyncpa [#allocation5], 1

</llo_original>
